<compile_context>
chip_gen: v7x
topology: tpu7x:2x2x1
jax: 0.10.0
libtpu: 0.0.40
codegen_flags: <defaults>
</compile_context>

<pallas_src>
import functools

import jax
import jax.numpy as jnp
import numpy as np
from jax import lax
from jax.experimental import pallas as pl
from jax.experimental.pallas import tpu as pltpu

LANE = 128  # TPU lane width; also the per-gate-group column block size


def _round_up(x, m):
    return (x + m - 1) // m * m


# ----------------------------------------------------------------------------
# Pallas kernel: embedding gather + bidirectional GRU cell + self-attention.
# ----------------------------------------------------------------------------
def _encoder_kernel(tok_ref, h_ref, emb_ref, wg_ref, gb_ref, wa_ref, ab_ref,
                    out_ref, *, B, Bp, H, E):
    f32 = jnp.float32
    H2 = 2 * H

    # ---- previous hidden state [h_fwd | h_bwd], lane offset 0, padded to Bp rows --
    hf = h_ref[0]                                        # (B, H)
    hb = h_ref[h_ref.shape[0] - 1]                       # (B, H)  (fwd==bwd if 2-D h0)
    hcat0 = jnp.concatenate([hf, hb], axis=1)            # (B, 2H)
    if Bp > B:
        hcat0 = jnp.concatenate(
            [hcat0, jnp.zeros((Bp - B, H2), f32)], axis=0)   # (Bp, 2H), pad rows = 0

    # ---- embedding gather on the MXU: one-hot(token) @ embedding ------------------
    # Token ids live in SMEM (scalar prefetch); the one-hot is built from iota vs.
    # scalar compares, so there is no XLA gather op and no dynamic row DMA.
    Vp = emb_ref.shape[0]                                # multiple of 128
    x = jnp.zeros((Bp, E), f32)
    for c in range(Vp // LANE):                          # static; 1 chunk for V<=128
        lane = lax.broadcasted_iota(jnp.int32, (Bp, LANE), 1) + c * LANE
        row = lax.broadcasted_iota(jnp.int32, (Bp, LANE), 0)
        oh = jnp.zeros((Bp, LANE), f32)
        for b in range(B):                               # static, tiny B
            oh = oh + jnp.where((row == b) & (lane == tok_ref[b]), 1.0, 0.0)
        x = x + jnp.dot(oh, emb_ref[c * LANE:(c + 1) * LANE, :],
                        preferred_element_type=f32)      # (Bp, E)

    # ---- bidirectional GRU cell: lane-aligned gate blocks [r | z | gi_n | gh_n] ----
    g = (jnp.dot(hcat0, wg_ref[0:H2, :], preferred_element_type=f32)       # h part
         + jnp.dot(x, wg_ref[H2:H2 + E, :], preferred_element_type=f32)    # x part
         + gb_ref[...])                                                    # biases
    r = jax.nn.sigmoid(g[:, 0:H2])
    z = jax.nn.sigmoid(g[:, LANE:LANE + H2])
    n = jnp.tanh(g[:, 2 * LANE:2 * LANE + H2] + r * g[:, 3 * LANE:3 * LANE + H2])
    h_new = (1.0 - z) * n + z * hcat0                    # (Bp, 2H) == hidden cat
    if Bp > B:                                           # bias add made pad rows != 0
        rmask = lax.broadcasted_iota(jnp.int32, (Bp, H2), 0) < B
        h_new = jnp.where(rmask, h_new, 0.0)
    outputs = h_new[:, 0:H] + h_new[:, H:H2]             # (Bp, H)  fwd + bwd

    # ---- self attention: w_s1 in lane block 0, w_s2 in lane block 1 of one slab ----
    wa = wa_ref[...]                                     # (2H, 256)
    ab = ab_ref[...]                                     # (1, 256) = [b_s1 | b_s2]
    s1 = jnp.dot(h_new, wa, preferred_element_type=f32) + ab
    a1 = jnp.tanh(s1[:, 0:H2])                           # tanh(w_s1(hidden) + b_s1)
    s2 = jnp.dot(a1, wa, preferred_element_type=f32) + ab
    logits = s2[:, LANE:LANE + H]                        # w_s2(...) + b_s2   (Bp, H)
    m = jnp.max(logits, axis=1, keepdims=True)
    p = jnp.exp(logits - m)
    a2 = p / jnp.sum(p, axis=1, keepdims=True)           # exact softmax
    # applied = self_attn.T @ hidden: batch contraction, transposed-LHS matmul
    # (padded rows of h_new are zero, so they add nothing here).
    attn = lax.dot_general(a2, h_new, (((0,), (0,)), ((), ())),
                           preferred_element_type=f32)   # (H, 2H)

    # ---- direct, lane-dense region stores (no in-register output-slab concat) -----
    out_ref[0:Bp, 0:LANE] = jnp.concatenate(
        [outputs, jnp.zeros((Bp, LANE - H), f32)], axis=1)
    out_ref[0:Bp, LANE:2 * LANE] = jnp.concatenate(
        [h_new, jnp.zeros((Bp, LANE - H2), f32)], axis=1)
    out_ref[Bp:Bp + H, 0:LANE] = jnp.concatenate(
        [attn, jnp.zeros((H, LANE - H2), f32)], axis=1)
    out_ref[Bp:Bp + H, LANE:2 * LANE] = jnp.zeros((H, LANE), f32)


# ----------------------------------------------------------------------------
# Host-side (one-time) packing of the parameters into lane-aligned slabs.
# ----------------------------------------------------------------------------
def pack_params(params):
    H = int(params["hidden_size"])
    emb = np.asarray(params["embedding"], np.float32)        # (V, E)
    V, E = emb.shape
    w_ih = np.asarray(params["w_ih_t"], np.float32)          # (2, E, 3H) gates (r,z,n)
    w_hh = np.asarray(params["w_hh_t"], np.float32)          # (2, H, 3H)
    b_ih = np.asarray(params["b_ih"], np.float32)            # (2, 1, 3H)
    b_hh = np.asarray(params["b_hh"], np.float32)            # (2, 1, 3H)

    assert 2 * H <= LANE and H % 8 == 0 and E % 8 == 0

    Vp = _round_up(V, LANE)
    embP = np.zeros((Vp, E), np.float32)
    embP[:V] = emb

    # GRU slab: rows = [h_fwd | h_bwd | x]; each gate group owns a 128-lane block:
    #   block 0 = r, block 1 = z, block 2 = gi_n (x part of n), block 3 = gh_n.
    wg = np.zeros((2 * H + E, 4 * LANE), np.float32)
    gb = np.zeros((1, 4 * LANE), np.float32)                 # combined gate biases
    for d in range(2):                                       # 0 = fwd, 1 = bwd
        hr = slice(d * H, (d + 1) * H)                       # h rows, direction d
        xr = slice(2 * H, 2 * H + E)                         # x rows (shared)
        for blk, gsl in ((0, slice(0, H)), (1, slice(H, 2 * H)), (3, slice(2 * H, 3 * H))):
            wg[hr, blk * LANE + d * H: blk * LANE + (d + 1) * H] = w_hh[d][:, gsl]
        for blk, gsl in ((0, slice(0, H)), (1, slice(H, 2 * H)), (2, slice(2 * H, 3 * H))):
            wg[xr, blk * LANE + d * H: blk * LANE + (d + 1) * H] = w_ih[d][:, gsl]
        gb[0, 0 * LANE + d * H:0 * LANE + (d + 1) * H] = b_ih[d][0, 0:H] + b_hh[d][0, 0:H]
        gb[0, 1 * LANE + d * H:1 * LANE + (d + 1) * H] = b_ih[d][0, H:2 * H] + b_hh[d][0, H:2 * H]
        gb[0, 2 * LANE + d * H:2 * LANE + (d + 1) * H] = b_ih[d][0, 2 * H:3 * H]
        gb[0, 3 * LANE + d * H:3 * LANE + (d + 1) * H] = b_hh[d][0, 2 * H:3 * H]

    # Attention slab: w_s1 in lane block 0 (cols 0:2H), w_s2 in lane block 1.
    wa = np.zeros((2 * H, 2 * LANE), np.float32)
    wa[:, 0:2 * H] = np.asarray(params["w_s1_t"], np.float32)
    wa[:, LANE:LANE + H] = np.asarray(params["w_s2_t"], np.float32)
    ab = np.zeros((1, 2 * LANE), np.float32)
    ab[0, 0:2 * H] = np.asarray(params["b_s1"], np.float32)[0]
    ab[0, LANE:LANE + H] = np.asarray(params["b_s2"], np.float32)[0]

    return {"emb": jnp.asarray(embP), "wg": jnp.asarray(wg), "gb": jnp.asarray(gb),
            "wa": jnp.asarray(wa), "ab": jnp.asarray(ab)}


def encoder_forward(tokens, hidden, packed):
    """Mirrors Encoder.forward with use_self_attn=True (seq_len == 1)."""
    E = packed["emb"].shape[1]
    H = packed["wa"].shape[0] // 2
    B = tokens.shape[0]
    Bp = _round_up(B, 8)

    tok = tokens.reshape(-1).astype(jnp.int32)               # (B,) -> SMEM prefetch
    h3 = hidden[None] if hidden.ndim == 2 else hidden        # (1|2, B, H), free view

    vspec = pl.BlockSpec(memory_space=pltpu.MemorySpace.VMEM)
    grid_spec = pltpu.PrefetchScalarGridSpec(
        num_scalar_prefetch=1,                               # token ids in SMEM
        grid=(1,),
        in_specs=[vspec] * 6,                                # h3, emb, wg, gb, wa, ab
        out_specs=vspec,
    )
    slab = pl.pallas_call(
        functools.partial(_encoder_kernel, B=B, Bp=Bp, H=H, E=E),
        out_shape=jax.ShapeDtypeStruct((Bp + H, 2 * LANE), jnp.float32),
        grid_spec=grid_spec,
        compiler_params=pltpu.CompilerParams(dimension_semantics=("arbitrary",)),
    )(tok, h3, packed["emb"], packed["wg"], packed["gb"], packed["wa"], packed["ab"])

    outputs = slab[:B, :H][:, None, :]                       # (B, 1, H)
    hcat = slab[:B, LANE:LANE + 2 * H]                       # (B, 2H)
    attn = slab[Bp:Bp + H, :2 * H]                           # (H, 2H)
    return outputs, hcat, attn


# ----------------------------------------------------------------------------
# Deterministic parameter construction (shapes from Encoder.__init__).
# ----------------------------------------------------------------------------
def make_params(key, vocab, embed, hidden):
    ks = jax.random.split(key, 13)
    s_ih = 1.0 / np.sqrt(embed)
    s_hh = 1.0 / np.sqrt(hidden)
    s_a = 1.0 / np.sqrt(2 * hidden)
    u = lambda k, shape, s: jax.random.uniform(k, shape, jnp.float32, -s, s)
    return {
        "hidden_size": hidden,
        "embedding": jax.random.normal(ks[0], (vocab, embed), jnp.float32),
        "w_ih_t": jnp.stack([u(ks[1], (embed, 3 * hidden), s_ih),
                             u(ks[2], (embed, 3 * hidden), s_ih)]),
        "w_hh_t": jnp.stack([u(ks[3], (hidden, 3 * hidden), s_hh),
                             u(ks[4], (hidden, 3 * hidden), s_hh)]),
        "b_ih": jnp.stack([u(ks[5], (1, 3 * hidden), s_hh),
                           u(ks[6], (1, 3 * hidden), s_hh)]),
        "b_hh": jnp.stack([u(ks[7], (1, 3 * hidden), s_hh),
                           u(ks[8], (1, 3 * hidden), s_hh)]),
        "w_s1_t": u(ks[9], (2 * hidden, 2 * hidden), s_a),
        "b_s1": u(ks[10], (1, 2 * hidden), s_a),
        "w_s2_t": u(ks[11], (2 * hidden, hidden), s_a),
        "b_s2": u(ks[12], (1, hidden), s_a),
    }


# Pure-JAX reference (same math as the PyTorch module) for a correctness check.
def encoder_ref(tokens, hidden, params):
    H = params["hidden_size"]
    x = jnp.take(params["embedding"], tokens[:, 0], axis=0)
    h0 = jnp.broadcast_to(hidden, (2,) + hidden.shape) if hidden.ndim == 2 else hidden

    def cell(d):
        gi = x @ params["w_ih_t"][d] + params["b_ih"][d]
        gh = h0[d] @ params["w_hh_t"][d] + params["b_hh"][d]
        r = jax.nn.sigmoid(gi[:, :H] + gh[:, :H])
        z = jax.nn.sigmoid(gi[:, H:2 * H] + gh[:, H:2 * H])
        n = jnp.tanh(gi[:, 2 * H:] + r * gh[:, 2 * H:])
        return (1.0 - z) * n + z * h0[d]

    h_f, h_b = cell(0), cell(1)
    outputs = (h_f + h_b)[:, None, :]
    hcat = jnp.concatenate([h_f, h_b], axis=1)
    a = jax.nn.softmax(jnp.tanh(hcat @ params["w_s1_t"] + params["b_s1"])
                       @ params["w_s2_t"] + params["b_s2"], axis=1)
    return outputs, hcat, a.T @ hcat


if __name__ == "__main__":
    VOCAB, EMBED, HIDDEN, BATCH = 50, 32, 32, 4

    key = jax.random.PRNGKey(0)
    k_par, k_tok, k_hid = jax.random.split(key, 3)

    params = make_params(k_par, VOCAB, EMBED, HIDDEN)
    packed = pack_params(params)
    tokens = jax.random.randint(k_tok, (BATCH, 1), 0, VOCAB, dtype=jnp.int32)
    hidden = jax.random.normal(k_hid, (BATCH, HIDDEN), jnp.float32)  # dim==2 path

    fwd = jax.jit(encoder_forward)
    outputs, hid_cat, hid_attn = jax.block_until_ready(fwd(tokens, hidden, packed))

    ref_out, ref_cat, ref_attn = encoder_ref(tokens, hidden, params)
    assert outputs.shape == (BATCH, 1, HIDDEN)
    assert hid_cat.shape == (BATCH, 2 * HIDDEN)
    assert hid_attn.shape == (HIDDEN, 2 * HIDDEN)
    np.testing.assert_allclose(np.asarray(outputs), np.asarray(ref_out),
                               atol=2e-5, rtol=2e-5)
    np.testing.assert_allclose(np.asarray(hid_cat), np.asarray(ref_cat),
                               atol=2e-5, rtol=2e-5)
    np.testing.assert_allclose(np.asarray(hid_attn), np.asarray(ref_attn),
                               atol=2e-4, rtol=2e-4)
    print("KERNEL_OK")
</pallas_src>

<mosaic_0001>
module attributes {stable_mosaic.version = 11 : i64} {
  func.func @_encoder_kernel(%arg0: i32, %arg1: memref<4xi32, #tpu.memory_space<smem>>, %arg2: memref<1x4x32xf32, #tpu.memory_space<vmem>>, %arg3: memref<128x32xf32, #tpu.memory_space<vmem>>, %arg4: memref<96x512xf32, #tpu.memory_space<vmem>>, %arg5: memref<1x512xf32, #tpu.memory_space<vmem>>, %arg6: memref<64x256xf32, #tpu.memory_space<vmem>>, %arg7: memref<1x256xf32, #tpu.memory_space<vmem>>, %arg8: memref<40x256xf32, #tpu.memory_space<vmem>>) attributes {dimension_semantics = [#tpu.dimension_semantics<arbitrary>], iteration_bounds = array<i64: 1>, scalar_prefetch = 1 : i64, scratch_operands = 0 : i64, tpu.core_type = #tpu.core_type<tc>, window_params = [{pipeline_mode = #tpu.pipeline_mode<synchronous>, transform_indices = @transform_0, window_bounds = array<i64: 1, 4, 32>}, {pipeline_mode = #tpu.pipeline_mode<synchronous>, transform_indices = @transform_1, window_bounds = array<i64: 128, 32>}, {pipeline_mode = #tpu.pipeline_mode<synchronous>, transform_indices = @transform_2, window_bounds = array<i64: 96, 512>}, {pipeline_mode = #tpu.pipeline_mode<synchronous>, transform_indices = @transform_3, window_bounds = array<i64: 1, 512>}, {pipeline_mode = #tpu.pipeline_mode<synchronous>, transform_indices = @transform_4, window_bounds = array<i64: 64, 256>}, {pipeline_mode = #tpu.pipeline_mode<synchronous>, transform_indices = @transform_5, window_bounds = array<i64: 1, 256>}, {pipeline_mode = #tpu.pipeline_mode<synchronous>, transform_indices = @transform_6, window_bounds = array<i64: 40, 256>}]} {
    %c0 = arith.constant 0 : index
    %c0_0 = arith.constant 0 : index
    %c0_1 = arith.constant 0 : index
    %0 = vector.load %arg2[%c0, %c0_0, %c0_1] : memref<1x4x32xf32, #tpu.memory_space<vmem>>, vector<1x4x32xf32>
    %1 = vector.shape_cast %0 : vector<1x4x32xf32> to vector<4x32xf32>
    %c0_2 = arith.constant 0 : index
    %c0_3 = arith.constant 0 : index
    %c0_4 = arith.constant 0 : index
    %2 = vector.load %arg2[%c0_2, %c0_3, %c0_4] : memref<1x4x32xf32, #tpu.memory_space<vmem>>, vector<1x4x32xf32>
    %3 = vector.shape_cast %2 : vector<1x4x32xf32> to vector<4x32xf32>
    %4 = tpu.concatenate %1, %3 in 1 : vector<4x32xf32>, vector<4x32xf32> -> vector<4x64xf32>
    %cst = arith.constant 0.000000e+00 : f32
    %5 = vector.broadcast %cst : f32 to vector<4x64xf32>
    %6 = tpu.concatenate %4, %5 in 0 : vector<4x64xf32>, vector<4x64xf32> -> vector<8x64xf32>
    %cst_5 = arith.constant 0.000000e+00 : f32
    %7 = vector.broadcast %cst_5 : f32 to vector<8x32xf32>
    %8 = tpu.iota {dimensions = array<i32: 1>} : vector<8x128xi32>
    %c0_i32 = arith.constant 0 : i32
    %9 = vector.broadcast %c0_i32 : i32 to vector<8x128xi32>
    %10 = arith.addi %8, %9 : vector<8x128xi32>
    %11 = tpu.iota {dimensions = array<i32: 0>} : vector<8x128xi32>
    %cst_6 = arith.constant 0.000000e+00 : f32
    %12 = vector.broadcast %cst_6 : f32 to vector<8x128xf32>
    %c0_i32_7 = arith.constant 0 : i32
    %13 = vector.broadcast %c0_i32_7 : i32 to vector<8x128xi32>
    %14 = arith.cmpi eq, %11, %13 : vector<8x128xi32>
    %c0_8 = arith.constant 0 : index
    %15 = memref.load %arg1[%c0_8] : memref<4xi32, #tpu.memory_space<smem>>
    %16 = vector.broadcast %15 : i32 to vector<8x128xi32>
    %17 = arith.cmpi eq, %10, %16 : vector<8x128xi32>
    %18 = arith.andi %14, %17 : vector<8x128xi1>
    %cst_9 = arith.constant 1.000000e+00 : f32
    %cst_10 = arith.constant 0.000000e+00 : f32
    %19 = vector.broadcast %cst_9 : f32 to vector<8x128xf32>
    %20 = vector.broadcast %cst_10 : f32 to vector<8x128xf32>
    %21 = arith.select %18, %19, %20 : vector<8x128xi1>, vector<8x128xf32>
    %22 = arith.addf %12, %21 : vector<8x128xf32>
    %c1_i32 = arith.constant 1 : i32
    %23 = vector.broadcast %c1_i32 : i32 to vector<8x128xi32>
    %24 = arith.cmpi eq, %11, %23 : vector<8x128xi32>
    %c1 = arith.constant 1 : index
    %25 = memref.load %arg1[%c1] : memref<4xi32, #tpu.memory_space<smem>>
    %26 = vector.broadcast %25 : i32 to vector<8x128xi32>
    %27 = arith.cmpi eq, %10, %26 : vector<8x128xi32>
    %28 = arith.andi %24, %27 : vector<8x128xi1>
    %cst_11 = arith.constant 1.000000e+00 : f32
    %cst_12 = arith.constant 0.000000e+00 : f32
    %29 = vector.broadcast %cst_11 : f32 to vector<8x128xf32>
    %30 = vector.broadcast %cst_12 : f32 to vector<8x128xf32>
    %31 = arith.select %28, %29, %30 : vector<8x128xi1>, vector<8x128xf32>
    %32 = arith.addf %22, %31 : vector<8x128xf32>
    %c2_i32 = arith.constant 2 : i32
    %33 = vector.broadcast %c2_i32 : i32 to vector<8x128xi32>
    %34 = arith.cmpi eq, %11, %33 : vector<8x128xi32>
    %c2 = arith.constant 2 : index
    %35 = memref.load %arg1[%c2] : memref<4xi32, #tpu.memory_space<smem>>
    %36 = vector.broadcast %35 : i32 to vector<8x128xi32>
    %37 = arith.cmpi eq, %10, %36 : vector<8x128xi32>
    %38 = arith.andi %34, %37 : vector<8x128xi1>
    %cst_13 = arith.constant 1.000000e+00 : f32
    %cst_14 = arith.constant 0.000000e+00 : f32
    %39 = vector.broadcast %cst_13 : f32 to vector<8x128xf32>
    %40 = vector.broadcast %cst_14 : f32 to vector<8x128xf32>
    %41 = arith.select %38, %39, %40 : vector<8x128xi1>, vector<8x128xf32>
    %42 = arith.addf %32, %41 : vector<8x128xf32>
    %c3_i32 = arith.constant 3 : i32
    %43 = vector.broadcast %c3_i32 : i32 to vector<8x128xi32>
    %44 = arith.cmpi eq, %11, %43 : vector<8x128xi32>
    %c3 = arith.constant 3 : index
    %45 = memref.load %arg1[%c3] : memref<4xi32, #tpu.memory_space<smem>>
    %46 = vector.broadcast %45 : i32 to vector<8x128xi32>
    %47 = arith.cmpi eq, %10, %46 : vector<8x128xi32>
    %48 = arith.andi %44, %47 : vector<8x128xi1>
    %cst_15 = arith.constant 1.000000e+00 : f32
    %cst_16 = arith.constant 0.000000e+00 : f32
    %49 = vector.broadcast %cst_15 : f32 to vector<8x128xf32>
    %50 = vector.broadcast %cst_16 : f32 to vector<8x128xf32>
    %51 = arith.select %48, %49, %50 : vector<8x128xi1>, vector<8x128xf32>
    %52 = arith.addf %42, %51 : vector<8x128xf32>
    %c0_17 = arith.constant 0 : index
    %c0_18 = arith.constant 0 : index
    %53 = vector.load %arg3[%c0_17, %c0_18] : memref<128x32xf32, #tpu.memory_space<vmem>>, vector<128x32xf32>
    %cst_19 = arith.constant dense<0.000000e+00> : vector<8x32xf32>
    %54 = tpu.matmul %52, %53, %cst_19 {dimension_numbers = #tpu.dot_dimension_numbers<[1], [0], [0], [1], [0, 0, 1, 1], [], []>} : vector<8x128xf32>, vector<128x32xf32>, vector<8x32xf32> -> vector<8x32xf32>
    %55 = arith.addf %7, %54 : vector<8x32xf32>
    %c0_20 = arith.constant 0 : index
    %c0_21 = arith.constant 0 : index
    %56 = vector.load %arg4[%c0_20, %c0_21] : memref<96x512xf32, #tpu.memory_space<vmem>>, vector<64x512xf32>
    %cst_22 = arith.constant dense<0.000000e+00> : vector<8x512xf32>
    %57 = tpu.matmul %6, %56, %cst_22 {dimension_numbers = #tpu.dot_dimension_numbers<[1], [0], [0], [1], [0, 0, 1, 1], [], []>} : vector<8x64xf32>, vector<64x512xf32>, vector<8x512xf32> -> vector<8x512xf32>
    %c64 = arith.constant 64 : index
    %c0_23 = arith.constant 0 : index
    %58 = vector.load %arg4[%c64, %c0_23] : memref<96x512xf32, #tpu.memory_space<vmem>>, vector<32x512xf32>
    %cst_24 = arith.constant dense<0.000000e+00> : vector<8x512xf32>
    %59 = tpu.matmul %55, %58, %cst_24 {dimension_numbers = #tpu.dot_dimension_numbers<[1], [0], [0], [1], [0, 0, 1, 1], [], []>} : vector<8x32xf32>, vector<32x512xf32>, vector<8x512xf32> -> vector<8x512xf32>
    %60 = arith.addf %57, %59 : vector<8x512xf32>
    %c0_25 = arith.constant 0 : index
    %c0_26 = arith.constant 0 : index
    %61 = vector.load %arg5[%c0_25, %c0_26] : memref<1x512xf32, #tpu.memory_space<vmem>>, vector<1x512xf32>
    %62 = vector.broadcast %61 : vector<1x512xf32> to vector<8x512xf32>
    %63 = arith.addf %60, %62 : vector<8x512xf32>
    %64 = vector.extract_strided_slice %63 {offsets = [0, 0], sizes = [8, 64], strides = [1, 1]} : vector<8x512xf32> to vector<8x64xf32>
    %65 = arith.negf %64 : vector<8x64xf32>
    %66 = math.exp %65 : vector<8x64xf32>
    %cst_27 = arith.constant 1.000000e+00 : f32
    %67 = vector.broadcast %cst_27 : f32 to vector<8x64xf32>
    %68 = arith.addf %67, %66 : vector<8x64xf32>
    %69 = arith.divf %67, %68 : vector<8x64xf32>
    %70 = vector.extract_strided_slice %63 {offsets = [0, 128], sizes = [8, 64], strides = [1, 1]} : vector<8x512xf32> to vector<8x64xf32>
    %71 = arith.negf %70 : vector<8x64xf32>
    %72 = math.exp %71 : vector<8x64xf32>
    %cst_28 = arith.constant 1.000000e+00 : f32
    %73 = vector.broadcast %cst_28 : f32 to vector<8x64xf32>
    %74 = arith.addf %73, %72 : vector<8x64xf32>
    %75 = arith.divf %73, %74 : vector<8x64xf32>
    %76 = vector.extract_strided_slice %63 {offsets = [0, 256], sizes = [8, 64], strides = [1, 1]} : vector<8x512xf32> to vector<8x64xf32>
    %77 = vector.extract_strided_slice %63 {offsets = [0, 384], sizes = [8, 64], strides = [1, 1]} : vector<8x512xf32> to vector<8x64xf32>
    %78 = arith.mulf %69, %77 : vector<8x64xf32>
    %79 = arith.addf %76, %78 : vector<8x64xf32>
    %80 = math.tanh %79 : vector<8x64xf32>
    %cst_29 = arith.constant 1.000000e+00 : f32
    %81 = vector.broadcast %cst_29 : f32 to vector<8x64xf32>
    %82 = arith.subf %81, %75 : vector<8x64xf32>
    %83 = arith.mulf %82, %80 : vector<8x64xf32>
    %84 = arith.mulf %75, %6 : vector<8x64xf32>
    %85 = arith.addf %83, %84 : vector<8x64xf32>
    %86 = tpu.iota {dimensions = array<i32: 0>} : vector<8x64xi32>
    %c4_i32 = arith.constant 4 : i32
    %87 = vector.broadcast %c4_i32 : i32 to vector<8x64xi32>
    %88 = arith.cmpi slt, %86, %87 : vector<8x64xi32>
    %cst_30 = arith.constant 0.000000e+00 : f32
    %89 = vector.broadcast %cst_30 : f32 to vector<8x64xf32>
    %90 = arith.select %88, %85, %89 : vector<8x64xi1>, vector<8x64xf32>
    %91 = vector.extract_strided_slice %90 {offsets = [0, 0], sizes = [8, 32], strides = [1, 1]} : vector<8x64xf32> to vector<8x32xf32>
    %92 = vector.extract_strided_slice %90 {offsets = [0, 32], sizes = [8, 32], strides = [1, 1]} : vector<8x64xf32> to vector<8x32xf32>
    %93 = arith.addf %91, %92 : vector<8x32xf32>
    %c0_31 = arith.constant 0 : index
    %c0_32 = arith.constant 0 : index
    %94 = vector.load %arg6[%c0_31, %c0_32] : memref<64x256xf32, #tpu.memory_space<vmem>>, vector<64x256xf32>
    %c0_33 = arith.constant 0 : index
    %c0_34 = arith.constant 0 : index
    %95 = vector.load %arg7[%c0_33, %c0_34] : memref<1x256xf32, #tpu.memory_space<vmem>>, vector<1x256xf32>
    %cst_35 = arith.constant dense<0.000000e+00> : vector<8x256xf32>
    %96 = tpu.matmul %90, %94, %cst_35 {dimension_numbers = #tpu.dot_dimension_numbers<[1], [0], [0], [1], [0, 0, 1, 1], [], []>} : vector<8x64xf32>, vector<64x256xf32>, vector<8x256xf32> -> vector<8x256xf32>
    %97 = vector.broadcast %95 : vector<1x256xf32> to vector<8x256xf32>
    %98 = arith.addf %96, %97 : vector<8x256xf32>
    %99 = vector.extract_strided_slice %98 {offsets = [0, 0], sizes = [8, 64], strides = [1, 1]} : vector<8x256xf32> to vector<8x64xf32>
    %100 = math.tanh %99 : vector<8x64xf32>
    %cst_36 = arith.constant dense<0.000000e+00> : vector<8x256xf32>
    %101 = tpu.matmul %100, %94, %cst_36 {dimension_numbers = #tpu.dot_dimension_numbers<[1], [0], [0], [1], [0, 0, 1, 1], [], []>} : vector<8x64xf32>, vector<64x256xf32>, vector<8x256xf32> -> vector<8x256xf32>
    %102 = vector.broadcast %95 : vector<1x256xf32> to vector<8x256xf32>
    %103 = arith.addf %101, %102 : vector<8x256xf32>
    %104 = vector.extract_strided_slice %103 {offsets = [0, 128], sizes = [8, 32], strides = [1, 1]} : vector<8x256xf32> to vector<8x32xf32>
    %cst_37 = arith.constant dense<0xFF800000> : vector<8xf32>
    %105 = vector.multi_reduction <maximumf>, %104, %cst_37 [1] : vector<8x32xf32> to vector<8xf32>
    %106 = vector.shape_cast %105 : vector<8xf32> to vector<8x1xf32>
    %107 = vector.broadcast %106 : vector<8x1xf32> to vector<8x32xf32>
    %108 = arith.subf %104, %107 : vector<8x32xf32>
    %109 = math.exp %108 : vector<8x32xf32>
    %cst_38 = arith.constant dense<0.000000e+00> : vector<8xf32>
    %110 = vector.multi_reduction <add>, %109, %cst_38 [1] : vector<8x32xf32> to vector<8xf32>
    %111 = vector.shape_cast %110 : vector<8xf32> to vector<8x1xf32>
    %112 = vector.broadcast %111 : vector<8x1xf32> to vector<8x32xf32>
    %113 = arith.divf %109, %112 : vector<8x32xf32>
    %cst_39 = arith.constant dense<0.000000e+00> : vector<32x64xf32>
    %114 = tpu.matmul %113, %90, %cst_39 {dimension_numbers = #tpu.dot_dimension_numbers<[0], [0], [1], [1], [0, 1, 1, 1], [], []>} : vector<8x32xf32>, vector<8x64xf32>, vector<32x64xf32> -> vector<32x64xf32>
    %cst_40 = arith.constant 0.000000e+00 : f32
    %115 = vector.broadcast %cst_40 : f32 to vector<8x96xf32>
    %116 = tpu.concatenate %93, %115 in 1 : vector<8x32xf32>, vector<8x96xf32> -> vector<8x128xf32>
    %c0_41 = arith.constant 0 : index
    %c0_42 = arith.constant 0 : index
    %117 = vector.load %arg8[%c0_41, %c0_42] : memref<40x256xf32, #tpu.memory_space<vmem>>, vector<8x128xf32>
    tpu.vector_store %arg8[%c0_41, %c0_42], %116 {strides = array<i32>} : memref<40x256xf32, #tpu.memory_space<vmem>>, vector<8x128xf32>,
    %cst_43 = arith.constant 0.000000e+00 : f32
    %118 = vector.broadcast %cst_43 : f32 to vector<8x64xf32>
    %119 = tpu.concatenate %90, %118 in 1 : vector<8x64xf32>, vector<8x64xf32> -> vector<8x128xf32>
    %c0_44 = arith.constant 0 : index
    %c128 = arith.constant 128 : index
    %120 = vector.load %arg8[%c0_44, %c128] : memref<40x256xf32, #tpu.memory_space<vmem>>, vector<8x128xf32>
    tpu.vector_store %arg8[%c0_44, %c128], %119 {strides = array<i32>} : memref<40x256xf32, #tpu.memory_space<vmem>>, vector<8x128xf32>,
    %cst_45 = arith.constant 0.000000e+00 : f32
    %121 = vector.broadcast %cst_45 : f32 to vector<32x64xf32>
    %122 = tpu.concatenate %114, %121 in 1 : vector<32x64xf32>, vector<32x64xf32> -> vector<32x128xf32>
    %c8 = arith.constant 8 : index
    %c0_46 = arith.constant 0 : index
    %123 = vector.load %arg8[%c8, %c0_46] : memref<40x256xf32, #tpu.memory_space<vmem>>, vector<32x128xf32>
    tpu.vector_store %arg8[%c8, %c0_46], %122 {strides = array<i32>} : memref<40x256xf32, #tpu.memory_space<vmem>>, vector<32x128xf32>,
    %cst_47 = arith.constant 0.000000e+00 : f32
    %124 = vector.broadcast %cst_47 : f32 to vector<32x128xf32>
    %c8_48 = arith.constant 8 : index
    %c128_49 = arith.constant 128 : index
    %125 = vector.load %arg8[%c8_48, %c128_49] : memref<40x256xf32, #tpu.memory_space<vmem>>, vector<32x128xf32>
    tpu.vector_store %arg8[%c8_48, %c128_49], %124 {strides = array<i32>} : memref<40x256xf32, #tpu.memory_space<vmem>>, vector<32x128xf32>,
    return
  }
  func.func @transform_0(%arg0: i32, %arg1: memref<4xi32, #tpu.memory_space<smem>>) -> (i32, i32, i32) {
    %c0_i32 = arith.constant 0 : i32
    %c0_i32_0 = arith.constant 0 : i32
    %c0_i32_1 = arith.constant 0 : i32
    %c0_i32_2 = arith.constant 0 : i32
    return %c0_i32, %c0_i32_0, %c0_i32_1 : i32, i32, i32
  }
  func.func @transform_1(%arg0: i32, %arg1: memref<4xi32, #tpu.memory_space<smem>>) -> (i32, i32) {
    %c0_i32 = arith.constant 0 : i32
    %c0_i32_0 = arith.constant 0 : i32
    %c0_i32_1 = arith.constant 0 : i32
    return %c0_i32, %c0_i32_0 : i32, i32
  }
  func.func @transform_2(%arg0: i32, %arg1: memref<4xi32, #tpu.memory_space<smem>>) -> (i32, i32) {
    %c0_i32 = arith.constant 0 : i32
    %c0_i32_0 = arith.constant 0 : i32
    %c0_i32_1 = arith.constant 0 : i32
    return %c0_i32, %c0_i32_0 : i32, i32
  }
  func.func @transform_3(%arg0: i32, %arg1: memref<4xi32, #tpu.memory_space<smem>>) -> (i32, i32) {
    %c0_i32 = arith.constant 0 : i32
    %c0_i32_0 = arith.constant 0 : i32
    %c0_i32_1 = arith.constant 0 : i32
    return %c0_i32, %c0_i32_0 : i32, i32
  }
  func.func @transform_4(%arg0: i32, %arg1: memref<4xi32, #tpu.memory_space<smem>>) -> (i32, i32) {
    %c0_i32 = arith.constant 0 : i32
    %c0_i32_0 = arith.constant 0 : i32
    %c0_i32_1 = arith.constant 0 : i32
    return %c0_i32, %c0_i32_0 : i32, i32
  }
  func.func @transform_5(%arg0: i32, %arg1: memref<4xi32, #tpu.memory_space<smem>>) -> (i32, i32) {
    %c0_i32 = arith.constant 0 : i32
    %c0_i32_0 = arith.constant 0 : i32
    %c0_i32_1 = arith.constant 0 : i32
    return %c0_i32, %c0_i32_0 : i32, i32
  }
  func.func @transform_6(%arg0: i32, %arg1: memref<4xi32, #tpu.memory_space<smem>>) -> (i32, i32) {
    %c0_i32 = arith.constant 0 : i32
    %c0_i32_0 = arith.constant 0 : i32
    %c0_i32_1 = arith.constant 0 : i32
    return %c0_i32, %c0_i32_0 : i32, i32
  }
}

</mosaic_0001>

<llo_original>
// kernel: encoder_forward.1
$region0: #{encoder_forward.1}
  #allocation0 [shape = 'u32[]', space=smem, size = 0x4, offset = 0x4, fixed_abs, tag = 'smem constant byte address 0x4 - core index']
  #allocation1 [shape = 'u32[144,128]{1,0:T(1,128)}', space=vmem, size = 0x12000, scoped, tag = 'internal scratch']
  #allocation2 [shape = 's32[1]{0}', space=sflag, size = 0x4, scoped, tag = 'scoped memory for encoder_forward.1']
  #allocation3 [shape = 'u8[512]{0}', space=smem, size = 0x200, scoped, tag = 'prefetched SMEM operand 0']
  %s0 = inlined_call_operand.vmem [shape: s32[4], index: 0, kind: input, shape index: {}]
  %s1 = inlined_call_operand.vmem [shape: f32[1,4,32], index: 1, kind: input, shape index: {}]
  %s2 = inlined_call_operand.vmem [shape: f32[128,32], index: 2, kind: input, shape index: {}]
  %s3 = inlined_call_operand.hbm [shape: f32[96,512], index: 3, kind: input, shape index: {}]
  %s4 = inlined_call_operand.vmem [shape: f32[1,512], index: 4, kind: input, shape index: {}]
  %s5 = inlined_call_operand.vmem [shape: f32[64,256], index: 5, kind: input, shape index: {}]
  %s6 = inlined_call_operand.vmem [shape: f32[1,256], index: 6, kind: input, shape index: {}]
  %s7 = inlined_call_operand.vmem [shape: f32[40,256], index: 7, kind: output, shape index: {}]
  %s8 = sld [smem:[#allocation0]]
  $region38: #{encoder_forward.1} parent=0
    _
  %s10 = ssub.s32 1, %s8
  %s11 = scalar_select 0, %s10, %s8
  %s12 = sshll.u32 %s0, 4
  %s13 = int_to_ptr.vmem [resolvable:$true] %s12
  %15 = dma.vmem_to_smem %s13, 16, [#allocation3], [#allocation2]
  %16 = dma.done [#allocation2], 16
  %17 = sfence
  $region1: #{encoder_forward.1} parent=0
    #allocation4 [shape = 'u8[196608]{0}', space=vmem, size = 0x30000, scoped, tag = 'input window, operand 3, single buffered']
    #allocation5 [shape = 's32[1]{0}', space=sflag, size = 0x4, scoped, tag = 'scoped memory for encoder_forward.1']
    %18 = vsyncpa [#allocation5], 0
    // Predicated region
    $region2: #{encoder_forward.1} parent=1 // pred_check
      _
    $region3: #{encoder_forward.1} parent=1 // pred_check_branch
      %20 = sbr.rel (0) target = $region5
    $region4: #{encoder_forward.1} parent=1 // pred_region
      _
    $region5: #{encoder_forward.1} parent=1 // pred_fallthru
      _
    // Predicated region
    $region6: #{encoder_forward.1} parent=1 // pred_check
      _
    $region7: #{encoder_forward.1} parent=1 // pred_check_branch
      %22 = sbr.rel (0) target = $region9
    $region8: #{encoder_forward.1} parent=1 // pred_region
      _
    $region9: #{encoder_forward.1} parent=1 // pred_fallthru
      _
    // Predicated region
    $region10: #{encoder_forward.1} parent=1 // pred_check
      _
    $region11: #{encoder_forward.1} parent=1 // pred_check_branch
      %24 = sbr.rel (0) target = $region13
    $region12: #{encoder_forward.1} parent=1 // pred_region
      %s26 = ssub.s32 6144, 6144
      %27 = vsyncadd [#allocation5], %s26
      %s28 = sshll.u32 [#allocation4], 4
      %s29 = int_to_ptr.vmem [resolvable:$true] %s28
      %34 = dma.hbm_to_vmem [thread:$0]  %s3, 6144, %s29, [#allocation5], 512, 512, 32
    $region13: #{encoder_forward.1} parent=1 // pred_fallthru
      _
    // Predicated region
    $region14: #{encoder_forward.1} parent=1 // pred_check
      _
    $region15: #{encoder_forward.1} parent=1 // pred_check_branch
      %36 = sbr.rel (0) target = $region17
    $region16: #{encoder_forward.1} parent=1 // pred_region
      _
    $region17: #{encoder_forward.1} parent=1 // pred_fallthru
      _
    // Predicated region
    $region18: #{encoder_forward.1} parent=1 // pred_check
      _
    $region19: #{encoder_forward.1} parent=1 // pred_check_branch
      %38 = sbr.rel (0) target = $region21
    $region20: #{encoder_forward.1} parent=1 // pred_region
      _
    $region21: #{encoder_forward.1} parent=1 // pred_fallthru
      _
    // Predicated region
    $region22: #{encoder_forward.1} parent=1 // pred_check
      _
    $region23: #{encoder_forward.1} parent=1 // pred_check_branch
      %40 = sbr.rel (0) target = $region25
    $region24: #{encoder_forward.1} parent=1 // pred_region
      _
    $region25: #{encoder_forward.1} parent=1 // pred_fallthru
      _
    // Predicated region
    $region26: #{encoder_forward.1} parent=1 // pred_check
      _
    $region27: #{encoder_forward.1} parent=1 // pred_check_branch
      %42 = sbr.rel (0) target = $region29
    $region28: #{encoder_forward.1} parent=1 // pred_region
      %43 = dma.done [#allocation5], 6144
    $region29: #{encoder_forward.1} parent=1 // pred_fallthru
      _
    %v44 = vld [vmem:[%s1] sm:$0xf]
    %46 = vrot.lane.b32.xlu0 %v44, 32
    %v47 = vpop.permute.xlu0 %46
    %vm49 = vcmask 261120
    %v50 = vsel %vm49, %v44, %v47
    %vm51 = vcmask 1043456
    %v52 = vsel %vm51, %v50, 0.0
    %v53 = vlaneseq
    %v54 = vand.u32 %v53, 127
    %v55 = vlaneseq
    %v56 = vshrl.u32 %v55, 7
    %vm57 = vcmp.eq.s32.totalorder %v56, 0
    %s58 = sld [smem:[#allocation3]]
    %v59 = vstv %s58
    %vm60 = vcmp.eq.s32.totalorder %v54, %v59
    %vm61 = vmand %vm57, %vm60
    %v62 = vsel %vm61, 1.0, 0.0
    %v63 = vadd.f32 %v62, 0.0
    %vm64 = vcmp.eq.s32.totalorder %v56, 1
    %s65 = sld [smem:[#allocation3 + $0x1]]
    %v66 = vstv %s65
    %vm67 = vcmp.eq.s32.totalorder %v54, %v66
    %vm68 = vmand %vm64, %vm67
    %v69 = vsel %vm68, 1.0, 0.0
    %v70 = vadd.f32 %v63, %v69
    %vm71 = vcmp.eq.s32.totalorder %v56, 2
    %s72 = sld [smem:[#allocation3 + $0x2]]
    %v73 = vstv %s72
    %vm74 = vcmp.eq.s32.totalorder %v54, %v73
    %vm75 = vmand %vm71, %vm74
    %v76 = vsel %vm75, 1.0, 0.0
    %v77 = vadd.f32 %v70, %v76
    %vm78 = vcmp.eq.s32.totalorder %v56, 3
    %s79 = sld [smem:[#allocation3 + $0x3]]
    %v80 = vstv %s79
    %vm81 = vcmp.eq.s32.totalorder %v54, %v80
    %vm82 = vmand %vm78, %vm81
    %v83 = vsel %vm82, 1.0, 0.0
    %v84 = vadd.f32 %v77, %v83
    %v85 = vld [vmem:[%s2] sm:$0xff]
    %v86 = vld [vmem:[%s2 + $0x8] sm:$0xff]
    %v87 = vld [vmem:[%s2 + $0x10] sm:$0xff]
    %v88 = vld [vmem:[%s2 + $0x18] sm:$0xff]
    %v89 = vld [vmem:[%s2 + $0x20] sm:$0xff]
    %v90 = vld [vmem:[%s2 + $0x28] sm:$0xff]
    %v91 = vld [vmem:[%s2 + $0x30] sm:$0xff]
    %v92 = vld [vmem:[%s2 + $0x38] sm:$0xff]
    %v93 = vld [vmem:[%s2 + $0x40] sm:$0xff]
    %v94 = vld [vmem:[%s2 + $0x48] sm:$0xff]
    %v95 = vld [vmem:[%s2 + $0x50] sm:$0xff]
    %v96 = vld [vmem:[%s2 + $0x58] sm:$0xff]
    %v97 = vld [vmem:[%s2 + $0x60] sm:$0xff]
    %v98 = vld [vmem:[%s2 + $0x68] sm:$0xff]
    %v99 = vld [vmem:[%s2 + $0x70] sm:$0xff]
    %v100 = vld [vmem:[%s2 + $0x78] sm:$0xff]
    %101 = vmatprep.subr.mxu0 0.0
    %102 = vmatpush1.msra.mxu0 %v85
    %103 = vmatprep.subr.mxu0 0.0
    %104 = vmatpush1.msra.mxu0 %v86
    %105 = vmatprep.subr.mxu0 0.0
    %106 = vmatpush1.msra.mxu0 %v87
    %107 = vmatprep.subr.mxu0 0.0
    %108 = vmatpush1.msra.mxu0 %v88
    %109 = vmatprep.subr.mxu0 0.0
    %110 = vmatpush1.msra.mxu0 %v89
    %111 = vmatprep.subr.mxu0 0.0
    %112 = vmatpush1.msra.mxu0 %v90
    %113 = vmatprep.subr.mxu0 0.0
    %114 = vmatpush1.msra.mxu0 %v91
    %115 = vmatprep.subr.mxu0 0.0
    %116 = vmatpush1.msra.mxu0 %v92
    %117 = vmatprep.subr.mxu0 0.0
    %118 = vmatpush1.msra.mxu0 %v93
    %119 = vmatprep.subr.mxu0 0.0
    %120 = vmatpush1.msra.mxu0 %v94
    %121 = vmatprep.subr.mxu0 0.0
    %122 = vmatpush1.msra.mxu0 %v95
    %123 = vmatprep.subr.mxu0 0.0
    %124 = vmatpush1.msra.mxu0 %v96
    %125 = vmatprep.subr.mxu0 0.0
    %126 = vmatpush1.msra.mxu0 %v97
    %127 = vmatprep.subr.mxu0 0.0
    %128 = vmatpush1.msra.mxu0 %v98
    %129 = vmatprep.subr.mxu0 0.0
    %130 = vmatpush1.msra.mxu0 %v99
    %131 = vmatprep.subr.mxu0 0.0
    %132 = vmatpush1.msra.mxu0 %v100
    %133 = vmatprep.subr.mxu0 0.0
    %134 = vmatpush1.msra.mxu0 0.0
    %135 = vmatprep.subr.mxu0 0.0
    %136 = vmatpush1.msra.mxu0 0.0
    %137 = vmatprep.subr.mxu0 0.0
    %138 = vmatpush1.msra.mxu0 0.0
    %139 = vmatprep.subr.mxu0 0.0
    %140 = vmatpush1.msra.mxu0 0.0
    %141 = vmatprep.subr.mxu0 0.0
    %142 = vmatpush1.msra.mxu0 0.0
    %143 = vmatprep.subr.mxu0 0.0
    %144 = vmatpush1.msra.mxu0 0.0
    %145 = vmatprep.subr.mxu0 0.0
    %146 = vmatpush1.msra.mxu0 0.0
    %147 = vmatprep.subr.mxu0 0.0
    %148 = vmatpush1.msra.mxu0 0.0
    %149 = vmatprep.subr.mxu0 0.0
    %150 = vmatpush1.msra.mxu0 0.0
    %151 = vmatprep.subr.mxu0 0.0
    %152 = vmatpush1.msra.mxu0 0.0
    %153 = vmatprep.subr.mxu0 0.0
    %154 = vmatpush1.msra.mxu0 0.0
    %155 = vmatprep.subr.mxu0 0.0
    %156 = vmatpush1.msra.mxu0 0.0
    %157 = vmatprep.subr.mxu0 0.0
    %158 = vmatpush1.msra.mxu0 0.0
    %159 = vmatprep.subr.mxu0 0.0
    %160 = vmatpush1.msra.mxu0 0.0
    %161 = vmatprep.subr.mxu0 0.0
    %162 = vmatpush1.msra.mxu0 0.0
    %163 = vmatprep.subr.mxu0 0.0
    %164 = vmatpush1.msra.mxu0 0.0
    %165 = vmatprep.mubr.f32.mxu0 0.0
    %166 = vmatmul.mubr.f32.gmra.mrb[0].mxu0 %v84
    %v167 = vpop.f32.mrb[0].mxu0
    %v168 = vadd.f32 0.0, %v167
    %v169 = vpop.f32.mrb[0].mxu0
    %170 = vdwg.mxu0
    %v171 = vld [vmem:[#allocation4] sm:$0xff]
    %v172 = vld [vmem:[#allocation4 + $0x8] sm:$0xff]
    %v173 = vld [vmem:[#allocation4 + $0x10] sm:$0xff]
    %v174 = vld [vmem:[#allocation4 + $0x18] sm:$0xff]
    %v175 = vld [vmem:[#allocation4 + $0x20] sm:$0xff]
    %v176 = vld [vmem:[#allocation4 + $0x28] sm:$0xff]
    %v177 = vld [vmem:[#allocation4 + $0x30] sm:$0xff]
    %v178 = vld [vmem:[#allocation4 + $0x38] sm:$0xff]
    %v179 = vld [vmem:[#allocation4 + $0x40] sm:$0xff]
    %v180 = vld [vmem:[#allocation4 + $0x48] sm:$0xff]
    %v181 = vld [vmem:[#allocation4 + $0x50] sm:$0xff]
    %v182 = vld [vmem:[#allocation4 + $0x58] sm:$0xff]
    %v183 = vld [vmem:[#allocation4 + $0x60] sm:$0xff]
    %v184 = vld [vmem:[#allocation4 + $0x68] sm:$0xff]
    %v185 = vld [vmem:[#allocation4 + $0x70] sm:$0xff]
    %v186 = vld [vmem:[#allocation4 + $0x78] sm:$0xff]
    %v187 = vld [vmem:[#allocation4 + $0x80] sm:$0xff]
    %v188 = vld [vmem:[#allocation4 + $0x88] sm:$0xff]
    %v189 = vld [vmem:[#allocation4 + $0x90] sm:$0xff]
    %v190 = vld [vmem:[#allocation4 + $0x98] sm:$0xff]
    %v191 = vld [vmem:[#allocation4 + $0xa0] sm:$0xff]
    %v192 = vld [vmem:[#allocation4 + $0xa8] sm:$0xff]
    %v193 = vld [vmem:[#allocation4 + $0xb0] sm:$0xff]
    %v194 = vld [vmem:[#allocation4 + $0xb8] sm:$0xff]
    %v195 = vld [vmem:[#allocation4 + $0xc0] sm:$0xff]
    %v196 = vld [vmem:[#allocation4 + $0xc8] sm:$0xff]
    %v197 = vld [vmem:[#allocation4 + $0xd0] sm:$0xff]
    %v198 = vld [vmem:[#allocation4 + $0xd8] sm:$0xff]
    %v199 = vld [vmem:[#allocation4 + $0xe0] sm:$0xff]
    %v200 = vld [vmem:[#allocation4 + $0xe8] sm:$0xff]
    %v201 = vld [vmem:[#allocation4 + $0xf0] sm:$0xff]
    %v202 = vld [vmem:[#allocation4 + $0xf8] sm:$0xff]
    %v203 = vld [vmem:[#allocation4 + $0x100] sm:$0xff]
    %v204 = vld [vmem:[#allocation4 + $0x108] sm:$0xff]
    %v205 = vld [vmem:[#allocation4 + $0x110] sm:$0xff]
    %v206 = vld [vmem:[#allocation4 + $0x118] sm:$0xff]
    %v207 = vld [vmem:[#allocation4 + $0x120] sm:$0xff]
    %v208 = vld [vmem:[#allocation4 + $0x128] sm:$0xff]
    %v209 = vld [vmem:[#allocation4 + $0x130] sm:$0xff]
    %v210 = vld [vmem:[#allocation4 + $0x138] sm:$0xff]
    %v211 = vld [vmem:[#allocation4 + $0x140] sm:$0xff]
    %v212 = vld [vmem:[#allocation4 + $0x148] sm:$0xff]
    %v213 = vld [vmem:[#allocation4 + $0x150] sm:$0xff]
    %v214 = vld [vmem:[#allocation4 + $0x158] sm:$0xff]
    %v215 = vld [vmem:[#allocation4 + $0x160] sm:$0xff]
    %v216 = vld [vmem:[#allocation4 + $0x168] sm:$0xff]
    %v217 = vld [vmem:[#allocation4 + $0x170] sm:$0xff]
    %v218 = vld [vmem:[#allocation4 + $0x178] sm:$0xff]
    %v220 = vsel %vm49, %v168, 0
    %222 = vmatprep.subr.mxu0 %v204
    %223 = vmatpush1.msra.mxu0 %v203
    %224 = vmatprep.subr.mxu0 %v208
    %225 = vmatpush1.msra.mxu0 %v207
    %226 = vmatprep.subr.mxu0 %v212
    %227 = vmatpush1.msra.mxu0 %v211
    %228 = vmatprep.subr.mxu0 %v216
    %229 = vmatpush1.msra.mxu0 %v215
    %230 = vmatprep.subr.mxu0 0.0
    %231 = vmatpush1.msra.mxu0 0.0
    %232 = vmatprep.subr.mxu0 0.0
    %233 = vmatpush1.msra.mxu0 0.0
    %234 = vmatprep.subr.mxu0 0.0
    %235 = vmatpush1.msra.mxu0 0.0
    %236 = vmatprep.subr.mxu0 0.0
    %237 = vmatpush1.msra.mxu0 0.0
    %238 = vmatprep.subr.mxu0 0.0
    %239 = vmatpush1.msra.mxu0 0.0
    %240 = vmatprep.subr.mxu0 0.0
    %241 = vmatpush1.msra.mxu0 0.0
    %242 = vmatprep.subr.mxu0 0.0
    %243 = vmatpush1.msra.mxu0 0.0
    %244 = vmatprep.subr.mxu0 0.0
    %245 = vmatpush1.msra.mxu0 0.0
    %246 = vmatprep.subr.mxu0 0.0
    %247 = vmatpush1.msra.mxu0 0.0
    %248 = vmatprep.subr.mxu0 0.0
    %249 = vmatpush1.msra.mxu0 0.0
    %250 = vmatprep.subr.mxu0 0.0
    %251 = vmatpush1.msra.mxu0 0.0
    %252 = vmatprep.subr.mxu0 0.0
    %253 = vmatpush1.msra.mxu0 0.0
    %254 = vmatprep.subr.mxu0 0.0
    %255 = vmatpush1.msra.mxu0 0.0
    %256 = vmatprep.subr.mxu0 0.0
    %257 = vmatpush1.msra.mxu0 0.0
    %258 = vmatprep.subr.mxu0 0.0
    %259 = vmatpush1.msra.mxu0 0.0
    %260 = vmatprep.subr.mxu0 0.0
    %261 = vmatpush1.msra.mxu0 0.0
    %262 = vmatprep.subr.mxu0 0.0
    %263 = vmatpush1.msra.mxu0 0.0
    %264 = vmatprep.subr.mxu0 0.0
    %265 = vmatpush1.msra.mxu0 0.0
    %266 = vmatprep.subr.mxu0 0.0
    %267 = vmatpush1.msra.mxu0 0.0
    %268 = vmatprep.subr.mxu0 0.0
    %269 = vmatpush1.msra.mxu0 0.0
    %270 = vmatprep.subr.mxu0 0.0
    %271 = vmatpush1.msra.mxu0 0.0
    %272 = vmatprep.subr.mxu0 0.0
    %273 = vmatpush1.msra.mxu0 0.0
    %274 = vmatprep.subr.mxu0 0.0
    %275 = vmatpush1.msra.mxu0 0.0
    %276 = vmatprep.subr.mxu0 0.0
    %277 = vmatpush1.msra.mxu0 0.0
    %278 = vmatprep.subr.mxu0 0.0
    %279 = vmatpush1.msra.mxu0 0.0
    %280 = vmatprep.subr.mxu0 0.0
    %281 = vmatpush1.msra.mxu0 0.0
    %282 = vmatprep.subr.mxu0 0.0
    %283 = vmatpush1.msra.mxu0 0.0
    %284 = vmatprep.subr.mxu0 0.0
    %285 = vmatpush1.msra.mxu0 0.0
    %286 = vmatprep.mubr.f32.mxu0 0.0
    %287 = vmatmul.mubr.f32.gmra.mrb[0].mxu0 %v220
    %v288 = vpop.f32.mrb[0].mxu0
    %v289 = vadd.f32 0.0, %v288
    %v290 = vpop.f32.mrb[0].mxu0
    %v291 = vadd.f32 0.0, %v290
    %292 = vdwg.mxu0
    %293 = vmatprep.subr.mxu0 %v206
    %294 = vmatpush1.msra.mxu0 %v205
    %295 = vmatprep.subr.mxu0 %v210
    %296 = vmatpush1.msra.mxu0 %v209
    %297 = vmatprep.subr.mxu0 %v214
    %298 = vmatpush1.msra.mxu0 %v213
    %299 = vmatprep.subr.mxu0 %v218
    %300 = vmatpush1.msra.mxu0 %v217
    %301 = vmatprep.subr.mxu0 0.0
    %302 = vmatpush1.msra.mxu0 0.0
    %303 = vmatprep.subr.mxu0 0.0
    %304 = vmatpush1.msra.mxu0 0.0
    %305 = vmatprep.subr.mxu0 0.0
    %306 = vmatpush1.msra.mxu0 0.0
    %307 = vmatprep.subr.mxu0 0.0
    %308 = vmatpush1.msra.mxu0 0.0
    %309 = vmatprep.subr.mxu0 0.0
    %310 = vmatpush1.msra.mxu0 0.0
    %311 = vmatprep.subr.mxu0 0.0
    %312 = vmatpush1.msra.mxu0 0.0
    %313 = vmatprep.subr.mxu0 0.0
    %314 = vmatpush1.msra.mxu0 0.0
    %315 = vmatprep.subr.mxu0 0.0
    %316 = vmatpush1.msra.mxu0 0.0
    %317 = vmatprep.subr.mxu0 0.0
    %318 = vmatpush1.msra.mxu0 0.0
    %319 = vmatprep.subr.mxu0 0.0
    %320 = vmatpush1.msra.mxu0 0.0
    %321 = vmatprep.subr.mxu0 0.0
    %322 = vmatpush1.msra.mxu0 0.0
    %323 = vmatprep.subr.mxu0 0.0
    %324 = vmatpush1.msra.mxu0 0.0
    %325 = vmatprep.subr.mxu0 0.0
    %326 = vmatpush1.msra.mxu0 0.0
    %327 = vmatprep.subr.mxu0 0.0
    %328 = vmatpush1.msra.mxu0 0.0
    %329 = vmatprep.subr.mxu0 0.0
    %330 = vmatpush1.msra.mxu0 0.0
    %331 = vmatprep.subr.mxu0 0.0
    %332 = vmatpush1.msra.mxu0 0.0
    %333 = vmatprep.subr.mxu0 0.0
    %334 = vmatpush1.msra.mxu0 0.0
    %335 = vmatprep.subr.mxu0 0.0
    %336 = vmatpush1.msra.mxu0 0.0
    %337 = vmatprep.subr.mxu0 0.0
    %338 = vmatpush1.msra.mxu0 0.0
    %339 = vmatprep.subr.mxu0 0.0
    %340 = vmatpush1.msra.mxu0 0.0
    %341 = vmatprep.subr.mxu0 0.0
    %342 = vmatpush1.msra.mxu0 0.0
    %343 = vmatprep.subr.mxu0 0.0
    %344 = vmatpush1.msra.mxu0 0.0
    %345 = vmatprep.subr.mxu0 0.0
    %346 = vmatpush1.msra.mxu0 0.0
    %347 = vmatprep.subr.mxu0 0.0
    %348 = vmatpush1.msra.mxu0 0.0
    %349 = vmatprep.subr.mxu0 0.0
    %350 = vmatpush1.msra.mxu0 0.0
    %351 = vmatprep.subr.mxu0 0.0
    %352 = vmatpush1.msra.mxu0 0.0
    %353 = vmatprep.subr.mxu0 0.0
    %354 = vmatpush1.msra.mxu0 0.0
    %355 = vmatprep.subr.mxu0 0.0
    %356 = vmatpush1.msra.mxu0 0.0
    %357 = vmatprep.mubr.f32.mxu0 0.0
    %358 = vmatmul.mubr.f32.gmra.mrb[0].mxu0 %v220
    %v359 = vpop.f32.mrb[0].mxu0
    %v360 = vadd.f32 0.0, %v359
    %v361 = vpop.f32.mrb[0].mxu0
    %v362 = vadd.f32 0.0, %v361
    %363 = vdwg.mxu0
    %vm364 = vcmask 523264
    %v366 = vsel %vm364, %v52, 0
    %368 = vmatprep.subr.mxu0 %v172
    %369 = vmatpush1.msra.mxu0 %v171
    %370 = vmatprep.subr.mxu0 %v176
    %371 = vmatpush1.msra.mxu0 %v175
    %372 = vmatprep.subr.mxu0 %v180
    %373 = vmatpush1.msra.mxu0 %v179
    %374 = vmatprep.subr.mxu0 %v184
    %375 = vmatpush1.msra.mxu0 %v183
    %376 = vmatprep.subr.mxu0 %v188
    %377 = vmatpush1.msra.mxu0 %v187
    %378 = vmatprep.subr.mxu0 %v192
    %379 = vmatpush1.msra.mxu0 %v191
    %380 = vmatprep.subr.mxu0 %v196
    %381 = vmatpush1.msra.mxu0 %v195
    %382 = vmatprep.subr.mxu0 %v200
    %383 = vmatpush1.msra.mxu0 %v199
    %384 = vmatprep.subr.mxu0 0.0
    %385 = vmatpush1.msra.mxu0 0.0
    %386 = vmatprep.subr.mxu0 0.0
    %387 = vmatpush1.msra.mxu0 0.0
    %388 = vmatprep.subr.mxu0 0.0
    %389 = vmatpush1.msra.mxu0 0.0
    %390 = vmatprep.subr.mxu0 0.0
    %391 = vmatpush1.msra.mxu0 0.0
    %392 = vmatprep.subr.mxu0 0.0
    %393 = vmatpush1.msra.mxu0 0.0
    %394 = vmatprep.subr.mxu0 0.0
    %395 = vmatpush1.msra.mxu0 0.0
    %396 = vmatprep.subr.mxu0 0.0
    %397 = vmatpush1.msra.mxu0 0.0
    %398 = vmatprep.subr.mxu0 0.0
    %399 = vmatpush1.msra.mxu0 0.0
    %400 = vmatprep.subr.mxu0 0.0
    %401 = vmatpush1.msra.mxu0 0.0
    %402 = vmatprep.subr.mxu0 0.0
    %403 = vmatpush1.msra.mxu0 0.0
    %404 = vmatprep.subr.mxu0 0.0
    %405 = vmatpush1.msra.mxu0 0.0
    %406 = vmatprep.subr.mxu0 0.0
    %407 = vmatpush1.msra.mxu0 0.0
    %408 = vmatprep.subr.mxu0 0.0
    %409 = vmatpush1.msra.mxu0 0.0
    %410 = vmatprep.subr.mxu0 0.0
    %411 = vmatpush1.msra.mxu0 0.0
    %412 = vmatprep.subr.mxu0 0.0
    %413 = vmatpush1.msra.mxu0 0.0
    %414 = vmatprep.subr.mxu0 0.0
    %415 = vmatpush1.msra.mxu0 0.0
    %416 = vmatprep.subr.mxu0 0.0
    %417 = vmatpush1.msra.mxu0 0.0
    %418 = vmatprep.subr.mxu0 0.0
    %419 = vmatpush1.msra.mxu0 0.0
    %420 = vmatprep.subr.mxu0 0.0
    %421 = vmatpush1.msra.mxu0 0.0
    %422 = vmatprep.subr.mxu0 0.0
    %423 = vmatpush1.msra.mxu0 0.0
    %424 = vmatprep.subr.mxu0 0.0
    %425 = vmatpush1.msra.mxu0 0.0
    %426 = vmatprep.subr.mxu0 0.0
    %427 = vmatpush1.msra.mxu0 0.0
    %428 = vmatprep.subr.mxu0 0.0
    %429 = vmatpush1.msra.mxu0 0.0
    %430 = vmatprep.subr.mxu0 0.0
    %431 = vmatpush1.msra.mxu0 0.0
    %432 = vmatprep.mubr.f32.mxu0 0.0
    %433 = vmatmul.mubr.f32.gmra.mrb[0].mxu0 %v366
    %v434 = vpop.f32.mrb[0].mxu0
    %v435 = vadd.f32 %v289, %v434
    %v436 = vpop.f32.mrb[0].mxu0
    %v437 = vadd.f32 %v291, %v436
    %438 = vdwg.mxu0
    %439 = vmatprep.subr.mxu0 %v174
    %440 = vmatpush1.msra.mxu0 %v173
    %441 = vmatprep.subr.mxu0 %v178
    %442 = vmatpush1.msra.mxu0 %v177
    %443 = vmatprep.subr.mxu0 %v182
    %444 = vmatpush1.msra.mxu0 %v181
    %445 = vmatprep.subr.mxu0 %v186
    %446 = vmatpush1.msra.mxu0 %v185
    %447 = vmatprep.subr.mxu0 %v190
    %448 = vmatpush1.msra.mxu0 %v189
    %449 = vmatprep.subr.mxu0 %v194
    %450 = vmatpush1.msra.mxu0 %v193
    %451 = vmatprep.subr.mxu0 %v198
    %452 = vmatpush1.msra.mxu0 %v197
    %453 = vmatprep.subr.mxu0 %v202
    %454 = vmatpush1.msra.mxu0 %v201
    %455 = vmatprep.subr.mxu0 0.0
    %456 = vmatpush1.msra.mxu0 0.0
    %457 = vmatprep.subr.mxu0 0.0
    %458 = vmatpush1.msra.mxu0 0.0
    %459 = vmatprep.subr.mxu0 0.0
    %460 = vmatpush1.msra.mxu0 0.0
    %461 = vmatprep.subr.mxu0 0.0
    %462 = vmatpush1.msra.mxu0 0.0
    %463 = vmatprep.subr.mxu0 0.0
    %464 = vmatpush1.msra.mxu0 0.0
    %465 = vmatprep.subr.mxu0 0.0
    %466 = vmatpush1.msra.mxu0 0.0
    %467 = vmatprep.subr.mxu0 0.0
    %468 = vmatpush1.msra.mxu0 0.0
    %469 = vmatprep.subr.mxu0 0.0
    %470 = vmatpush1.msra.mxu0 0.0
    %471 = vmatprep.subr.mxu0 0.0
    %472 = vmatpush1.msra.mxu0 0.0
    %473 = vmatprep.subr.mxu0 0.0
    %474 = vmatpush1.msra.mxu0 0.0
    %475 = vmatprep.subr.mxu0 0.0
    %476 = vmatpush1.msra.mxu0 0.0
    %477 = vmatprep.subr.mxu0 0.0
    %478 = vmatpush1.msra.mxu0 0.0
    %479 = vmatprep.subr.mxu0 0.0
    %480 = vmatpush1.msra.mxu0 0.0
    %481 = vmatprep.subr.mxu0 0.0
    %482 = vmatpush1.msra.mxu0 0.0
    %483 = vmatprep.subr.mxu0 0.0
    %484 = vmatpush1.msra.mxu0 0.0
    %485 = vmatprep.subr.mxu0 0.0
    %486 = vmatpush1.msra.mxu0 0.0
    %487 = vmatprep.subr.mxu0 0.0
    %488 = vmatpush1.msra.mxu0 0.0
    %489 = vmatprep.subr.mxu0 0.0
    %490 = vmatpush1.msra.mxu0 0.0
    %491 = vmatprep.subr.mxu0 0.0
    %492 = vmatpush1.msra.mxu0 0.0
    %493 = vmatprep.subr.mxu0 0.0
    %494 = vmatpush1.msra.mxu0 0.0
    %495 = vmatprep.subr.mxu0 0.0
    %496 = vmatpush1.msra.mxu0 0.0
    %497 = vmatprep.subr.mxu0 0.0
    %498 = vmatpush1.msra.mxu0 0.0
    %499 = vmatprep.subr.mxu0 0.0
    %500 = vmatpush1.msra.mxu0 0.0
    %501 = vmatprep.subr.mxu0 0.0
    %502 = vmatpush1.msra.mxu0 0.0
    %503 = vmatprep.mubr.f32.mxu0 0.0
    %504 = vmatmul.mubr.f32.gmra.mrb[0].mxu0 %v366
    %v505 = vpop.f32.mrb[0].mxu0
    %v506 = vadd.f32 %v360, %v505
    %v507 = vpop.f32.mrb[0].mxu0
    %v508 = vadd.f32 %v362, %v507
    %509 = vdwg.mxu0
    %v510 = vld [vmem:[%s4] sm:$0xf]
    %v512 = vlaneseq
    %v513 = vshrl.u32 %v512, 7
    %v514 = vsub.s32 0, %v513
    %v515 = vrot.slane %v510, %v514
    %v516 = vlaneseq
    %v517 = vshrl.u32 %v516, 7
    %v518 = vsub.s32 1, %v517
    %v519 = vrot.slane %v510, %v518
    %v520 = vlaneseq
    %v521 = vshrl.u32 %v520, 7
    %v522 = vsub.s32 2, %v521
    %v523 = vrot.slane %v510, %v522
    %v524 = vlaneseq
    %v525 = vshrl.u32 %v524, 7
    %v526 = vsub.s32 3, %v525
    %v527 = vrot.slane %v510, %v526
    %v532 = vadd.f32 %v435, %v515
    %v533 = vadd.f32 %v437, %v519
    %v534 = vadd.f32 %v506, %v523
    %v535 = vadd.f32 %v508, %v527
    %v536 = vxor.u32 %v532, 2147483648
    %v537 = vmul.f32 %v536, 1.442695
    %v538 = vpow.pop %v537
    %v539 = vadd.f32 %v538, 1.0
    %v540 = vrcp.pop %v539
    %v541 = vmul.f32 1.0, %v540
    %v542 = vxor.u32 %v533, 2147483648
    %v543 = vmul.f32 %v542, 1.442695
    %v544 = vpow.pop %v543
    %v545 = vadd.f32 %v544, 1.0
    %v546 = vrcp.pop %v545
    %v547 = vmul.f32 1.0, %v546
    %v548 = vmul.f32 %v541, %v535
    %v549 = vadd.f32 %v534, %v548
    %v550 = vtanh.pop %v549
    %v551 = vsub.f32 1.0, %v547
    %v552 = vmul.f32 %v551, %v550
    %v553 = vmul.f32 %v547, %v52
    %v554 = vadd.f32 %v552, %v553
    %vm555 = vcmp.lt.s32.totalorder %v56, 4
    %v556 = vsel %vm555, %v554, 0.0
    %558 = vrot.lane.b32.xlu0 %v556, 96
    %v559 = vpop.permute.xlu0 %558
    %v561 = vadd.f32 %v556, %v559
    %v562 = vld [vmem:[%s5] sm:$0xff]
    %v563 = vld [vmem:[%s5 + $0x8] sm:$0xff]
    %v564 = vld [vmem:[%s5 + $0x10] sm:$0xff]
    %v565 = vld [vmem:[%s5 + $0x18] sm:$0xff]
    %v566 = vld [vmem:[%s5 + $0x20] sm:$0xff]
    %v567 = vld [vmem:[%s5 + $0x28] sm:$0xff]
    %v568 = vld [vmem:[%s5 + $0x30] sm:$0xff]
    %v569 = vld [vmem:[%s5 + $0x38] sm:$0xff]
    %v570 = vld [vmem:[%s5 + $0x40] sm:$0xff]
    %v571 = vld [vmem:[%s5 + $0x48] sm:$0xff]
    %v572 = vld [vmem:[%s5 + $0x50] sm:$0xff]
    %v573 = vld [vmem:[%s5 + $0x58] sm:$0xff]
    %v574 = vld [vmem:[%s5 + $0x60] sm:$0xff]
    %v575 = vld [vmem:[%s5 + $0x68] sm:$0xff]
    %v576 = vld [vmem:[%s5 + $0x70] sm:$0xff]
    %v577 = vld [vmem:[%s5 + $0x78] sm:$0xff]
    %v578 = vld [vmem:[%s6] sm:$0x3]
    %v580 = vlaneseq
    %v581 = vshrl.u32 %v580, 7
    %v582 = vsub.s32 0, %v581
    %v583 = vrot.slane %v578, %v582
    %v584 = vlaneseq
    %v585 = vshrl.u32 %v584, 7
    %v586 = vsub.s32 1, %v585
    %v587 = vrot.slane %v578, %v586
    %v590 = vsel %vm364, %v556, 0
    %592 = vmatprep.subr.mxu0 %v563
    %593 = vmatpush1.msra.mxu0 %v562
    %594 = vmatprep.subr.mxu0 %v565
    %595 = vmatpush1.msra.mxu0 %v564
    %596 = vmatprep.subr.mxu0 %v567
    %597 = vmatpush1.msra.mxu0 %v566
    %598 = vmatprep.subr.mxu0 %v569
    %599 = vmatpush1.msra.mxu0 %v568
    %600 = vmatprep.subr.mxu0 %v571
    %601 = vmatpush1.msra.mxu0 %v570
    %602 = vmatprep.subr.mxu0 %v573
    %603 = vmatpush1.msra.mxu0 %v572
    %604 = vmatprep.subr.mxu0 %v575
    %605 = vmatpush1.msra.mxu0 %v574
    %606 = vmatprep.subr.mxu0 %v577
    %607 = vmatpush1.msra.mxu0 %v576
    %608 = vmatprep.subr.mxu0 0.0
    %609 = vmatpush1.msra.mxu0 0.0
    %610 = vmatprep.subr.mxu0 0.0
    %611 = vmatpush1.msra.mxu0 0.0
    %612 = vmatprep.subr.mxu0 0.0
    %613 = vmatpush1.msra.mxu0 0.0
    %614 = vmatprep.subr.mxu0 0.0
    %615 = vmatpush1.msra.mxu0 0.0
    %616 = vmatprep.subr.mxu0 0.0
    %617 = vmatpush1.msra.mxu0 0.0
    %618 = vmatprep.subr.mxu0 0.0
    %619 = vmatpush1.msra.mxu0 0.0
    %620 = vmatprep.subr.mxu0 0.0
    %621 = vmatpush1.msra.mxu0 0.0
    %622 = vmatprep.subr.mxu0 0.0
    %623 = vmatpush1.msra.mxu0 0.0
    %624 = vmatprep.subr.mxu0 0.0
    %625 = vmatpush1.msra.mxu0 0.0
    %626 = vmatprep.subr.mxu0 0.0
    %627 = vmatpush1.msra.mxu0 0.0
    %628 = vmatprep.subr.mxu0 0.0
    %629 = vmatpush1.msra.mxu0 0.0
    %630 = vmatprep.subr.mxu0 0.0
    %631 = vmatpush1.msra.mxu0 0.0
    %632 = vmatprep.subr.mxu0 0.0
    %633 = vmatpush1.msra.mxu0 0.0
    %634 = vmatprep.subr.mxu0 0.0
    %635 = vmatpush1.msra.mxu0 0.0
    %636 = vmatprep.subr.mxu0 0.0
    %637 = vmatpush1.msra.mxu0 0.0
    %638 = vmatprep.subr.mxu0 0.0
    %639 = vmatpush1.msra.mxu0 0.0
    %640 = vmatprep.subr.mxu0 0.0
    %641 = vmatpush1.msra.mxu0 0.0
    %642 = vmatprep.subr.mxu0 0.0
    %643 = vmatpush1.msra.mxu0 0.0
    %644 = vmatprep.subr.mxu0 0.0
    %645 = vmatpush1.msra.mxu0 0.0
    %646 = vmatprep.subr.mxu0 0.0
    %647 = vmatpush1.msra.mxu0 0.0
    %648 = vmatprep.subr.mxu0 0.0
    %649 = vmatpush1.msra.mxu0 0.0
    %650 = vmatprep.subr.mxu0 0.0
    %651 = vmatpush1.msra.mxu0 0.0
    %652 = vmatprep.subr.mxu0 0.0
    %653 = vmatpush1.msra.mxu0 0.0
    %654 = vmatprep.subr.mxu0 0.0
    %655 = vmatpush1.msra.mxu0 0.0
    %656 = vmatprep.mubr.f32.mxu0 0.0
    %657 = vmatmul.mubr.f32.gmra.mrb[0].mxu0 %v590
    %v658 = vpop.f32.mrb[0].mxu0
    %v659 = vadd.f32 %v583, %v658
    %v660 = vpop.f32.mrb[0].mxu0
    %661 = vdwg.mxu0
    %v662 = vtanh.pop %v659
    %v664 = vsel %vm364, %v662, 0
    %666 = vmatprep.subr.mxu0 %v563
    %667 = vmatpush1.msra.mxu0 %v562
    %668 = vmatprep.subr.mxu0 %v565
    %669 = vmatpush1.msra.mxu0 %v564
    %670 = vmatprep.subr.mxu0 %v567
    %671 = vmatpush1.msra.mxu0 %v566
    %672 = vmatprep.subr.mxu0 %v569
    %673 = vmatpush1.msra.mxu0 %v568
    %674 = vmatprep.subr.mxu0 %v571
    %675 = vmatpush1.msra.mxu0 %v570
    %676 = vmatprep.subr.mxu0 %v573
    %677 = vmatpush1.msra.mxu0 %v572
    %678 = vmatprep.subr.mxu0 %v575
    %679 = vmatpush1.msra.mxu0 %v574
    %680 = vmatprep.subr.mxu0 %v577
    %681 = vmatpush1.msra.mxu0 %v576
    %682 = vmatprep.subr.mxu0 0.0
    %683 = vmatpush1.msra.mxu0 0.0
    %684 = vmatprep.subr.mxu0 0.0
    %685 = vmatpush1.msra.mxu0 0.0
    %686 = vmatprep.subr.mxu0 0.0
    %687 = vmatpush1.msra.mxu0 0.0
    %688 = vmatprep.subr.mxu0 0.0
    %689 = vmatpush1.msra.mxu0 0.0
    %690 = vmatprep.subr.mxu0 0.0
    %691 = vmatpush1.msra.mxu0 0.0
    %692 = vmatprep.subr.mxu0 0.0
    %693 = vmatpush1.msra.mxu0 0.0
    %694 = vmatprep.subr.mxu0 0.0
    %695 = vmatpush1.msra.mxu0 0.0
    %696 = vmatprep.subr.mxu0 0.0
    %697 = vmatpush1.msra.mxu0 0.0
    %698 = vmatprep.subr.mxu0 0.0
    %699 = vmatpush1.msra.mxu0 0.0
    %700 = vmatprep.subr.mxu0 0.0
    %701 = vmatpush1.msra.mxu0 0.0
    %702 = vmatprep.subr.mxu0 0.0
    %703 = vmatpush1.msra.mxu0 0.0
    %704 = vmatprep.subr.mxu0 0.0
    %705 = vmatpush1.msra.mxu0 0.0
    %706 = vmatprep.subr.mxu0 0.0
    %707 = vmatpush1.msra.mxu0 0.0
    %708 = vmatprep.subr.mxu0 0.0
    %709 = vmatpush1.msra.mxu0 0.0
    %710 = vmatprep.subr.mxu0 0.0
    %711 = vmatpush1.msra.mxu0 0.0
    %712 = vmatprep.subr.mxu0 0.0
    %713 = vmatpush1.msra.mxu0 0.0
    %714 = vmatprep.subr.mxu0 0.0
    %715 = vmatpush1.msra.mxu0 0.0
    %716 = vmatprep.subr.mxu0 0.0
    %717 = vmatpush1.msra.mxu0 0.0
    %718 = vmatprep.subr.mxu0 0.0
    %719 = vmatpush1.msra.mxu0 0.0
    %720 = vmatprep.subr.mxu0 0.0
    %721 = vmatpush1.msra.mxu0 0.0
    %722 = vmatprep.subr.mxu0 0.0
    %723 = vmatpush1.msra.mxu0 0.0
    %724 = vmatprep.subr.mxu0 0.0
    %725 = vmatpush1.msra.mxu0 0.0
    %726 = vmatprep.subr.mxu0 0.0
    %727 = vmatpush1.msra.mxu0 0.0
    %728 = vmatprep.subr.mxu0 0.0
    %729 = vmatpush1.msra.mxu0 0.0
    %730 = vmatprep.mubr.f32.mxu0 0.0
    %731 = vmatmul.mubr.f32.gmra.mrb[0].mxu0 %v664
    %v732 = vpop.f32.mrb[0].mxu0
    %v733 = vpop.f32.mrb[0].mxu0
    %v734 = vadd.f32 %v587, %v733
    %735 = vdwg.mxu0
    %v736 = vsel %vm49, %v734, -inf
    %737 = vmax.xlane.f32.xlu0 %v736
    %v738 = vpop.xlane.xlu0 %737
    %v739 = vsub.f32 %v734, %v738
    %v740 = vmul.f32 %v739, 1.442695
    %v741 = vpow.pop %v740
    %v742 = vsel %vm49, %v741, 0.0
    %743 = vadd.xlane.f32.xlu0 %v742
    %v744 = vpop.xlane.xlu0 %743
    %v745 = vrcp.pop %v744
    %v746 = vmul.f32 %v741, %v745
    %747 = vxpose.xlu0.b32.start [1/16] %v746, 128
    %748 = vxpose.xlu0.b32.cont [2/16] 0.0, 128
    %749 = vxpose.xlu0.b32.cont [3/16] 0.0, 128
    %750 = vxpose.xlu0.b32.cont [4/16] 0.0, 128
    %751 = vxpose.xlu0.b32.cont [5/16] 0.0, 128
    %752 = vxpose.xlu0.b32.cont [6/16] 0.0, 128
    %753 = vxpose.xlu0.b32.cont [7/16] 0.0, 128
    %754 = vxpose.xlu0.b32.cont [8/16] 0.0, 128
    %755 = vxpose.xlu0.b32.cont [9/16] 0.0, 128
    %756 = vxpose.xlu0.b32.cont [10/16] 0.0, 128
    %757 = vxpose.xlu0.b32.cont [11/16] 0.0, 128
    %758 = vxpose.xlu0.b32.cont [12/16] 0.0, 128
    %759 = vxpose.xlu0.b32.cont [13/16] 0.0, 128
    %760 = vxpose.xlu0.b32.cont [14/16] 0.0, 128
    %761 = vxpose.xlu0.b32.cont [15/16] 0.0, 128
    %762 = vxpose.xlu0.b32.end [16/16] 0.0, 128
    %v763 = vpop.trf.xlu0
    %v764 = vpop.trf.xlu0
    %v765 = vpop.trf.xlu0
    %v766 = vpop.trf.xlu0
    %v767 = vpop.trf.xlu0
    %v768 = vpop.trf.xlu0
    %v769 = vpop.trf.xlu0
    %v770 = vpop.trf.xlu0
    %v771 = vpop.trf.xlu0
    %v772 = vpop.trf.xlu0
    %v773 = vpop.trf.xlu0
    %v774 = vpop.trf.xlu0
    %v775 = vpop.trf.xlu0
    %v776 = vpop.trf.xlu0
    %v777 = vpop.trf.xlu0
    %v778 = vpop.trf.xlu0
    %vm779 = vcmask 64512
    %v781 = vsel %vm779, %v763, 0
    %v784 = vsel %vm779, %v764, 0
    %v787 = vsel %vm779, %v765, 0
    %v790 = vsel %vm779, %v766, 0
    %792 = vmatprep.subr.mxu0 0.0
    %793 = vmatpush1.msra.mxu0 %v556
    %794 = vmatprep.subr.mxu0 0.0
    %795 = vmatpush1.msra.mxu0 0.0
    %796 = vmatprep.subr.mxu0 0.0
    %797 = vmatpush1.msra.mxu0 0.0
    %798 = vmatprep.subr.mxu0 0.0
    %799 = vmatpush1.msra.mxu0 0.0
    %800 = vmatprep.subr.mxu0 0.0
    %801 = vmatpush1.msra.mxu0 0.0
    %802 = vmatprep.subr.mxu0 0.0
    %803 = vmatpush1.msra.mxu0 0.0
    %804 = vmatprep.subr.mxu0 0.0
    %805 = vmatpush1.msra.mxu0 0.0
    %806 = vmatprep.subr.mxu0 0.0
    %807 = vmatpush1.msra.mxu0 0.0
    %808 = vmatprep.subr.mxu0 0.0
    %809 = vmatpush1.msra.mxu0 0.0
    %810 = vmatprep.subr.mxu0 0.0
    %811 = vmatpush1.msra.mxu0 0.0
    %812 = vmatprep.subr.mxu0 0.0
    %813 = vmatpush1.msra.mxu0 0.0
    %814 = vmatprep.subr.mxu0 0.0
    %815 = vmatpush1.msra.mxu0 0.0
    %816 = vmatprep.subr.mxu0 0.0
    %817 = vmatpush1.msra.mxu0 0.0
    %818 = vmatprep.subr.mxu0 0.0
    %819 = vmatpush1.msra.mxu0 0.0
    %820 = vmatprep.subr.mxu0 0.0
    %821 = vmatpush1.msra.mxu0 0.0
    %822 = vmatprep.subr.mxu0 0.0
    %823 = vmatpush1.msra.mxu0 0.0
    %824 = vmatprep.subr.mxu0 0.0
    %825 = vmatpush1.msra.mxu0 0.0
    %826 = vmatprep.subr.mxu0 0.0
    %827 = vmatpush1.msra.mxu0 0.0
    %828 = vmatprep.subr.mxu0 0.0
    %829 = vmatpush1.msra.mxu0 0.0
    %830 = vmatprep.subr.mxu0 0.0
    %831 = vmatpush1.msra.mxu0 0.0
    %832 = vmatprep.subr.mxu0 0.0
    %833 = vmatpush1.msra.mxu0 0.0
    %834 = vmatprep.subr.mxu0 0.0
    %835 = vmatpush1.msra.mxu0 0.0
    %836 = vmatprep.subr.mxu0 0.0
    %837 = vmatpush1.msra.mxu0 0.0
    %838 = vmatprep.subr.mxu0 0.0
    %839 = vmatpush1.msra.mxu0 0.0
    %840 = vmatprep.subr.mxu0 0.0
    %841 = vmatpush1.msra.mxu0 0.0
    %842 = vmatprep.subr.mxu0 0.0
    %843 = vmatpush1.msra.mxu0 0.0
    %844 = vmatprep.subr.mxu0 0.0
    %845 = vmatpush1.msra.mxu0 0.0
    %846 = vmatprep.subr.mxu0 0.0
    %847 = vmatpush1.msra.mxu0 0.0
    %848 = vmatprep.subr.mxu0 0.0
    %849 = vmatpush1.msra.mxu0 0.0
    %850 = vmatprep.subr.mxu0 0.0
    %851 = vmatpush1.msra.mxu0 0.0
    %852 = vmatprep.subr.mxu0 0.0
    %853 = vmatpush1.msra.mxu0 0.0
    %854 = vmatprep.subr.mxu0 0.0
    %855 = vmatpush1.msra.mxu0 0.0
    %856 = vmatprep.mubr.f32.mxu0 0.0
    %857 = vmatmul.mubr.f32.gmra.mrb[0].mxu0 %v781
    %v858 = vpop.f32.mrb[0].mxu0
    %v859 = vadd.f32 0.0, %v858
    %v860 = vpop.f32.mrb[0].mxu0
    %861 = vmatprep.mubr.f32.mxu0 0.0
    %862 = vmatmul.mubr.f32.gmra.mrb[0].mxu0 %v784
    %v863 = vpop.f32.mrb[0].mxu0
    %v864 = vadd.f32 0.0, %v863
    %v865 = vpop.f32.mrb[0].mxu0
    %866 = vmatprep.mubr.f32.mxu0 0.0
    %867 = vmatmul.mubr.f32.gmra.mrb[0].mxu0 %v787
    %v868 = vpop.f32.mrb[0].mxu0
    %v869 = vadd.f32 0.0, %v868
    %v870 = vpop.f32.mrb[0].mxu0
    %871 = vmatprep.mubr.f32.mxu0 0.0
    %872 = vmatmul.mubr.f32.gmra.mrb[0].mxu0 %v790
    %v873 = vpop.f32.mrb[0].mxu0
    %v874 = vadd.f32 0.0, %v873
    %v875 = vpop.f32.mrb[0].mxu0
    %876 = vdwg.mxu0
    %v877 = vsel %vm49, %v561, 0.0
    %878 = vst [vmem:[%s7] sm:$0xff] %v877
    %v879 = vsel %vm364, %v556, 0.0
    %880 = vst [vmem:[%s7 + $0x8] sm:$0xff] %v879
    %v881 = vsel %vm364, %v859, 0.0
    %v882 = vsel %vm364, %v864, 0.0
    %v883 = vsel %vm364, %v869, 0.0
    %v884 = vsel %vm364, %v874, 0.0
    %885 = vst [vmem:[%s7 + $0x10] sm:$0xff] %v881
    %886 = vst [vmem:[%s7 + $0x20] sm:$0xff] %v882
    %887 = vst [vmem:[%s7 + $0x30] sm:$0xff] %v883
    %888 = vst [vmem:[%s7 + $0x40] sm:$0xff] %v884
    %889 = vst [vmem:[%s7 + $0x18] sm:$0xff] 0.0
    %890 = vst [vmem:[%s7 + $0x28] sm:$0xff] 0.0
    %891 = vst [vmem:[%s7 + $0x38] sm:$0xff] 0.0
    %892 = vst [vmem:[%s7 + $0x48] sm:$0xff] 0.0
    // Predicated region
    $region30: #{encoder_forward.1} parent=1 // pred_check
      _
    $region31: #{encoder_forward.1} parent=1 // pred_check_branch
      %894 = sbr.rel (0) target = $region33
    $region32: #{encoder_forward.1} parent=1 // pred_region
      _
    $region33: #{encoder_forward.1} parent=1 // pred_fallthru
      _
    // Predicated region
    $region34: #{encoder_forward.1} parent=1 // pred_check
      _
    $region35: #{encoder_forward.1} parent=1 // pred_check_branch
      %896 = sbr.rel (0) target = $region37
    $region36: #{encoder_forward.1} parent=1 // pred_region
      _
    $region37: #{encoder_forward.1} parent=1 // pred_fallthru
      _
    %897 = vsyncpa [#allocation5], 1

</llo_original>
